<compile_context>
chip_gen: v5e
topology: v5e:2x2
jax: 0.10.0
libtpu: 0.0.40
codegen_flags: <defaults>
</compile_context>

<pallas_src>
from typing import NamedTuple, Tuple

import jax
import jax.numpy as jnp
from jax.experimental import pallas as pl
from jax.experimental.pallas import tpu as pltpu

_LANE = 128        # vreg lane width
_SUBLANE = 8       # f32 sublane count
_NEG_BIG = -1e30   # effectively -inf for padded logit lanes (softmax path)
_MAX_TM = 512      # batch-tile cap; keeps grid steps few, VMEM tiny


def _round_up(x, m):
    return ((x + m - 1) // m) * m


class PolicyParams(NamedTuple):
    state_dim: int
    hidden_dim: int
    action_dim: int
    state_pad: int
    hidden_pad: int
    action_pad: int
    two_action: bool
    arrays: Tuple[jnp.ndarray, jnp.ndarray, jnp.ndarray, jnp.ndarray]


def prepare_params(w1, b1, w2, b2, *, use_two_action_shortcut=True):
    """Pad / re-layout parameters once at init time (hoisted out of the forward).

    w1: [S, H], b1: [H] or [1, H], w2: [H, A], b2: [A] or [1, A]  (torch-transposed).
    """
    S, H = w1.shape
    A = w2.shape[1]
    S_pad = _round_up(max(S, _SUBLANE), _SUBLANE)   # sublane-align the tiny state dim
    H_pad = _round_up(H, _LANE)                     # lane-align hidden
    A_pad = _LANE                                   # lane-dense output slab

    b1 = jnp.reshape(b1, (1, H)).astype(jnp.float32)
    b2 = jnp.reshape(b2, (1, A)).astype(jnp.float32)

    w1_p = jnp.pad(w1.astype(jnp.float32), ((0, S_pad - S), (0, H_pad - H)))
    b1_p = jnp.pad(b1, ((0, 0), (0, H_pad - H)))

    two_action = bool(use_two_action_shortcut and A == 2)
    if two_action:
        # Fold fc2 into a single logit-difference column (w2[:,0]-w2[:,1],
        # b2[0]-b2[1]) replicated across all 128 lanes, so the kernel needs no
        # cross-lane broadcast, no row-max and no row-sum.
        wd = (w2[:, 0] - w2[:, 1]).astype(jnp.float32)              # [H]
        bd = (b2[0, 0] - b2[0, 1]).astype(jnp.float32)              # scalar
        w2_p = jnp.pad(jnp.broadcast_to(wd[:, None], (H, A_pad)),
                       ((0, H_pad - H), (0, 0)))
        b2_p = jnp.full((1, A_pad), bd, jnp.float32)
    else:
        w2_p = jnp.pad(w2.astype(jnp.float32), ((0, H_pad - H), (0, A_pad - A)))
        # Padded action lanes carry a -1e30 bias -> exp == 0 -> softmax ignores them.
        # (jnp.pad preserves the real-action lanes; no extra .set fixup needed.)
        b2_p = jnp.pad(b2, ((0, 0), (0, A_pad - A)), constant_values=_NEG_BIG)

    return PolicyParams(S, H, A, S_pad, H_pad, A_pad, two_action,
                        (w1_p, b1_p, w2_p, b2_p))


def _policy_kernel_sigmoid2(x_ref, w1_ref, b1_ref, wd_ref, bd_ref, out_ref):
    """action_dim == 2: softmax([l0, l1]) == [sigmoid(l0-l1), 1 - sigmoid(l0-l1)]."""
    x = x_ref[...]                                                     # [tm, S_pad] f32
    h = jnp.dot(x, w1_ref[...], preferred_element_type=jnp.float32) + b1_ref[...]
    h = jnp.maximum(h, 0.0)                                            # [tm, H_pad]
    # Logit difference d = l0 - l1, identical in every lane by construction of wd/bd.
    d = jnp.dot(h, wd_ref[...], preferred_element_type=jnp.float32) + bd_ref[...]
    p0 = 1.0 / (1.0 + jnp.exp(-d))                                     # exact sigmoid
    lane = jax.lax.broadcasted_iota(jnp.int32, d.shape, 1)
    out = jnp.where(lane == 0, p0, jnp.where(lane == 1, 1.0 - p0, 0.0))
    out_ref[...] = out.astype(out_ref.dtype)


def _policy_kernel_softmax(x_ref, w1_ref, b1_ref, w2_ref, b2_ref, out_ref):
    """Generic action_dim: max-stabilized softmax with an exact divide."""
    x = x_ref[...]
    h = jnp.dot(x, w1_ref[...], preferred_element_type=jnp.float32) + b1_ref[...]
    h = jnp.maximum(h, 0.0)
    logits = jnp.dot(h, w2_ref[...], preferred_element_type=jnp.float32) + b2_ref[...]
    m = jnp.max(logits, axis=1, keepdims=True)
    e = jnp.exp(logits - m)          # padded lanes: exp(-1e30 - m) == 0
    out_ref[...] = (e / jnp.sum(e, axis=1, keepdims=True)).astype(out_ref.dtype)


def policy_net_forward_padded(x, params: PolicyParams):
    """x: [B, state_dim] -> padded probs slab [B_pad, 128] (lanes >= action_dim are 0)."""
    B, S = x.shape
    assert S == params.state_dim
    S_pad, H_pad, A_pad = params.state_pad, params.hidden_pad, params.action_pad

    # Batch tile: one big block for small batches; capped (even block count) for
    # large rollout batches.  On v7x (2 TCs) multi-block grids shard across cores.
    tm = min(_round_up(max(B, 1), _SUBLANE), _MAX_TM)
    B_pad = _round_up(B, tm)
    n_blocks = B_pad // tm

    x_p = x.astype(jnp.float32)
    if (B_pad, S_pad) != (B, S):
        x_p = jnp.pad(x_p, ((0, B_pad - B), (0, S_pad - S)))

    w1_p, b1_p, w2_p, b2_p = params.arrays
    H, A = params.hidden_dim, params.action_dim

    # Advisory cost: real (unpadded) work only.
    cost = pl.CostEstimate(
        flops=2 * B * (S * H + H * A),
        transcendentals=B * A,
        bytes_accessed=4 * (B * S + S * H + H + H * A + A + B * A),
    )

    kernel = _policy_kernel_sigmoid2 if params.two_action else _policy_kernel_softmax

    return pl.pallas_call(
        kernel,
        out_shape=jax.ShapeDtypeStruct((B_pad, A_pad), jnp.float32),
        grid=(n_blocks,),
        in_specs=[
            pl.BlockSpec((tm, S_pad), lambda i: (i, 0)),     # x: tiled over batch
            pl.BlockSpec((S_pad, H_pad), lambda i: (0, 0)),  # w1: VMEM-resident
            pl.BlockSpec((1, H_pad), lambda i: (0, 0)),      # b1: VMEM-resident
            pl.BlockSpec((H_pad, A_pad), lambda i: (0, 0)),  # w2 / folded diff
            pl.BlockSpec((1, A_pad), lambda i: (0, 0)),      # b2 / folded diff
        ],
        out_specs=pl.BlockSpec((tm, A_pad), lambda i: (i, 0)),
        compiler_params=pltpu.CompilerParams(
            dimension_semantics=("parallel",),               # shard batch across TCs
        ),
        cost_estimate=cost,
    )(x_p, w1_p, b1_p, w2_p, b2_p)


def policy_net_forward(x, params: PolicyParams):
    """x: [B, state_dim] -> probs [B, action_dim].

    NOTE: the trailing slice is a convenience copy for this demo; PPO rollout
    code can consume policy_net_forward_padded()'s slab directly and skip it.
    """
    out = policy_net_forward_padded(x, params)
    return out[:x.shape[0], :params.action_dim]


def init_params(key, state_dim, hidden_dim, action_dim):
    """Mimic torch.nn.Linear default init: U[-1/sqrt(fan_in), 1/sqrt(fan_in)]."""
    k1, k2, k3, k4 = jax.random.split(key, 4)
    bound1 = 1.0 / jnp.sqrt(jnp.float32(state_dim))
    bound2 = 1.0 / jnp.sqrt(jnp.float32(hidden_dim))
    w1 = jax.random.uniform(k1, (state_dim, hidden_dim), jnp.float32, -bound1, bound1)
    b1 = jax.random.uniform(k2, (1, hidden_dim), jnp.float32, -bound1, bound1)
    w2 = jax.random.uniform(k3, (hidden_dim, action_dim), jnp.float32, -bound2, bound2)
    b2 = jax.random.uniform(k4, (1, action_dim), jnp.float32, -bound2, bound2)
    return w1, b1, w2, b2


def reference_forward(x, w1, b1, w2, b2):
    h = jnp.maximum(x @ w1 + b1, 0.0)
    return jax.nn.softmax(h @ w2 + b2, axis=1)


if __name__ == "__main__":
    # CartPole-v1: state_dim=4, action_dim=2; hidden_dim=128 as in the module.
    state_dim, hidden_dim, action_dim = 4, 128, 2

    key = jax.random.PRNGKey(0)
    kx, kp = jax.random.split(key)
    w1, b1, w2, b2 = init_params(kp, state_dim, hidden_dim, action_dim)

    # Padding / weight folding done ONCE here, not per forward call.
    params = prepare_params(w1, b1, w2, b2)

    # Exercise: tiny batch (padded), medium (1 grid step), large (2 parallel steps).
    for batch in (5, 256, 1024):
        xb = jax.random.normal(jax.random.fold_in(kx, batch), (batch, state_dim),
                               jnp.float32)
        probs = jax.block_until_ready(policy_net_forward(xb, params))
        ref = reference_forward(xb, w1, b1, w2, b2)
        assert probs.shape == (batch, action_dim)
        assert jnp.allclose(probs, ref, atol=1e-4, rtol=1e-4)
        assert jnp.allclose(jnp.sum(probs, axis=1), 1.0, atol=1e-5)

    # Also exercise the generic softmax path (action_dim != 2, exact divide).
    a3 = 3
    w1c, b1c, w2c, b2c = init_params(jax.random.PRNGKey(1), state_dim, hidden_dim, a3)
    params3 = prepare_params(w1c, b1c, w2c, b2c)
    x3 = jax.random.normal(jax.random.PRNGKey(2), (64, state_dim), jnp.float32)
    probs3 = jax.block_until_ready(policy_net_forward(x3, params3))
    ref3 = reference_forward(x3, w1c, b1c, w2c, b2c)
    assert probs3.shape == (64, a3)
    assert jnp.allclose(probs3, ref3, atol=1e-4, rtol=1e-4)
    assert jnp.allclose(jnp.sum(probs3, axis=1), 1.0, atol=1e-5)

    print("KERNEL_OK")
</pallas_src>

<mosaic_0001>
module attributes {stable_mosaic.version = 11 : i64} {
  func.func @_policy_kernel_sigmoid2(%arg0: i32, %arg1: memref<8x8xf32, #tpu.memory_space<vmem>>, %arg2: memref<8x128xf32, #tpu.memory_space<vmem>>, %arg3: memref<1x128xf32, #tpu.memory_space<vmem>>, %arg4: memref<128x128xf32, #tpu.memory_space<vmem>>, %arg5: memref<1x128xf32, #tpu.memory_space<vmem>>, %arg6: memref<8x128xf32, #tpu.memory_space<vmem>>) attributes {dimension_semantics = [#tpu.dimension_semantics<parallel>], iteration_bounds = array<i64: 1>, scalar_prefetch = 0 : i64, scratch_operands = 0 : i64, tpu.core_type = #tpu.core_type<tc>, window_params = [{transform_indices = @transform_0, window_bounds = array<i64: 8, 8>}, {pipeline_mode = #tpu.pipeline_mode<synchronous>, transform_indices = @transform_1, window_bounds = array<i64: 8, 128>}, {pipeline_mode = #tpu.pipeline_mode<synchronous>, transform_indices = @transform_2, window_bounds = array<i64: 1, 128>}, {pipeline_mode = #tpu.pipeline_mode<synchronous>, transform_indices = @transform_3, window_bounds = array<i64: 128, 128>}, {pipeline_mode = #tpu.pipeline_mode<synchronous>, transform_indices = @transform_4, window_bounds = array<i64: 1, 128>}, {transform_indices = @transform_5, window_bounds = array<i64: 8, 128>}]} {
    %c0 = arith.constant 0 : index
    %c0_0 = arith.constant 0 : index
    %0 = vector.load %arg1[%c0, %c0_0] : memref<8x8xf32, #tpu.memory_space<vmem>>, vector<8x8xf32>
    %c0_1 = arith.constant 0 : index
    %c0_2 = arith.constant 0 : index
    %1 = vector.load %arg2[%c0_1, %c0_2] : memref<8x128xf32, #tpu.memory_space<vmem>>, vector<8x128xf32>
    %cst = arith.constant dense<0.000000e+00> : vector<8x128xf32>
    %2 = tpu.matmul %0, %1, %cst {dimension_numbers = #tpu.dot_dimension_numbers<[1], [0], [0], [1], [0, 0, 1, 1], [], []>} : vector<8x8xf32>, vector<8x128xf32>, vector<8x128xf32> -> vector<8x128xf32>
    %c0_3 = arith.constant 0 : index
    %c0_4 = arith.constant 0 : index
    %3 = vector.load %arg3[%c0_3, %c0_4] : memref<1x128xf32, #tpu.memory_space<vmem>>, vector<1x128xf32>
    %4 = vector.broadcast %3 : vector<1x128xf32> to vector<8x128xf32>
    %5 = arith.addf %2, %4 : vector<8x128xf32>
    %cst_5 = arith.constant 0.000000e+00 : f32
    %6 = vector.broadcast %cst_5 : f32 to vector<8x128xf32>
    %7 = arith.maximumf %5, %6 : vector<8x128xf32>
    %c0_6 = arith.constant 0 : index
    %c0_7 = arith.constant 0 : index
    %8 = vector.load %arg4[%c0_6, %c0_7] : memref<128x128xf32, #tpu.memory_space<vmem>>, vector<128x128xf32>
    %cst_8 = arith.constant dense<0.000000e+00> : vector<8x128xf32>
    %9 = tpu.matmul %7, %8, %cst_8 {dimension_numbers = #tpu.dot_dimension_numbers<[1], [0], [0], [1], [0, 0, 1, 1], [], []>} : vector<8x128xf32>, vector<128x128xf32>, vector<8x128xf32> -> vector<8x128xf32>
    %c0_9 = arith.constant 0 : index
    %c0_10 = arith.constant 0 : index
    %10 = vector.load %arg5[%c0_9, %c0_10] : memref<1x128xf32, #tpu.memory_space<vmem>>, vector<1x128xf32>
    %11 = vector.broadcast %10 : vector<1x128xf32> to vector<8x128xf32>
    %12 = arith.addf %9, %11 : vector<8x128xf32>
    %cst_11 = arith.constant 0.000000e+00 : f32
    %13 = vector.broadcast %cst_11 : f32 to vector<8x128xf32>
    %14 = arith.subf %13, %12 : vector<8x128xf32>
    %15 = math.exp %14 : vector<8x128xf32>
    %cst_12 = arith.constant 1.000000e+00 : f32
    %16 = vector.broadcast %cst_12 : f32 to vector<8x128xf32>
    %17 = arith.addf %16, %15 : vector<8x128xf32>
    %cst_13 = arith.constant 1.000000e+00 : f32
    %18 = vector.broadcast %cst_13 : f32 to vector<8x128xf32>
    %19 = arith.divf %18, %17 : vector<8x128xf32>
    %20 = tpu.iota {dimensions = array<i32: 1>} : vector<8x128xi32>
    %c0_i32 = arith.constant 0 : i32
    %21 = vector.broadcast %c0_i32 : i32 to vector<8x128xi32>
    %22 = arith.cmpi eq, %20, %21 : vector<8x128xi32>
    %c1_i32 = arith.constant 1 : i32
    %23 = vector.broadcast %c1_i32 : i32 to vector<8x128xi32>
    %24 = arith.cmpi eq, %20, %23 : vector<8x128xi32>
    %cst_14 = arith.constant 1.000000e+00 : f32
    %25 = vector.broadcast %cst_14 : f32 to vector<8x128xf32>
    %26 = arith.subf %25, %19 : vector<8x128xf32>
    %cst_15 = arith.constant 0.000000e+00 : f32
    %27 = vector.broadcast %cst_15 : f32 to vector<8x128xf32>
    %28 = arith.select %24, %26, %27 : vector<8x128xi1>, vector<8x128xf32>
    %29 = arith.select %22, %19, %28 : vector<8x128xi1>, vector<8x128xf32>
    %c0_16 = arith.constant 0 : index
    %c0_17 = arith.constant 0 : index
    %30 = vector.load %arg6[%c0_16, %c0_17] : memref<8x128xf32, #tpu.memory_space<vmem>>, vector<8x128xf32>
    tpu.vector_store %arg6[%c0_16, %c0_17], %29 {strides = array<i32>} : memref<8x128xf32, #tpu.memory_space<vmem>>, vector<8x128xf32>,
    return
  }
  func.func @transform_0(%arg0: i32) -> (i32, i32) {
    %c0_i32 = arith.constant 0 : i32
    %c0_i32_0 = arith.constant 0 : i32
    return %arg0, %c0_i32 : i32, i32
  }
  func.func @transform_1(%arg0: i32) -> (i32, i32) {
    %c0_i32 = arith.constant 0 : i32
    %c0_i32_0 = arith.constant 0 : i32
    %c0_i32_1 = arith.constant 0 : i32
    return %c0_i32, %c0_i32_0 : i32, i32
  }
  func.func @transform_2(%arg0: i32) -> (i32, i32) {
    %c0_i32 = arith.constant 0 : i32
    %c0_i32_0 = arith.constant 0 : i32
    %c0_i32_1 = arith.constant 0 : i32
    return %c0_i32, %c0_i32_0 : i32, i32
  }
  func.func @transform_3(%arg0: i32) -> (i32, i32) {
    %c0_i32 = arith.constant 0 : i32
    %c0_i32_0 = arith.constant 0 : i32
    %c0_i32_1 = arith.constant 0 : i32
    return %c0_i32, %c0_i32_0 : i32, i32
  }
  func.func @transform_4(%arg0: i32) -> (i32, i32) {
    %c0_i32 = arith.constant 0 : i32
    %c0_i32_0 = arith.constant 0 : i32
    %c0_i32_1 = arith.constant 0 : i32
    return %c0_i32, %c0_i32_0 : i32, i32
  }
  func.func @transform_5(%arg0: i32) -> (i32, i32) {
    %c0_i32 = arith.constant 0 : i32
    %c0_i32_0 = arith.constant 0 : i32
    return %arg0, %c0_i32 : i32, i32
  }
}

</mosaic_0001>

<llo_original>
// kernel: tpu_custom_call.1
$region0: #{tpu_custom_call.1}
  #allocation0 [shape = 'u32[]', space=smem, size = 0x4, offset = 0x4, fixed_abs, tag = 'smem constant byte address 0x4 - core index']
  #allocation1 [shape = 'u32[72,128]{1,0:T(1,128)}', space=vmem, size = 0x9000, scoped, tag = 'internal scratch']
  %s0 = inlined_call_operand.hbm [shape: f32[8,8], index: 0, kind: input, shape index: {}]
  %s1 = inlined_call_operand.hbm [shape: f32[8,128], index: 1, kind: input, shape index: {}]
  %s2 = inlined_call_operand.vmem [shape: f32[1,128], index: 2, kind: input, shape index: {}]
  %s3 = inlined_call_operand.hbm [shape: f32[128,128], index: 3, kind: input, shape index: {}]
  %s4 = inlined_call_operand.vmem [shape: f32[1,128], index: 4, kind: input, shape index: {}]
  %s5 = inlined_call_operand.hbm [shape: f32[8,128], index: 5, kind: output, shape index: {}]
  %s6 = sld [smem:[#allocation0]]
  $region42: #{tpu_custom_call.1} parent=0
    _
  %s8 = ssub.s32 1, %s6
  %s9 = scalar_select 0, %s8, %s6
  $region1: #{tpu_custom_call.1} parent=0
    #allocation2 [shape = 'u8[4096]{0}', space=vmem, size = 0x1000, scoped, tag = 'input window, operand 0, single buffered']
    #allocation3 [shape = 's32[1]{0}', space=sflag, size = 0x4, scoped, tag = 'scoped memory for tpu_custom_call.1']
    #allocation4 [shape = 's32[1]{0}', space=sflag, size = 0x4, scoped, tag = 'scoped memory for tpu_custom_call.1']
    #allocation5 [shape = 'u8[4096]{0}', space=vmem, size = 0x1000, scoped, tag = 'input window, operand 1, single buffered']
    #allocation6 [shape = 's32[1]{0}', space=sflag, size = 0x4, scoped, tag = 'scoped memory for tpu_custom_call.1']
    #allocation7 [shape = 'u8[65536]{0}', space=vmem, size = 0x10000, scoped, tag = 'input window, operand 3, single buffered']
    #allocation8 [shape = 'u8[4096]{0}', space=vmem, size = 0x1000, scoped, tag = 'output window, operand 0, single buffered']
    %10 = vsyncpa [#allocation3], 0
    %11 = vsyncpa [#allocation6], 0
    %12 = vsyncpa [#allocation4], 0
    // Predicated region
    $region2: #{tpu_custom_call.1} parent=1 // pred_check
      _
    $region3: #{tpu_custom_call.1} parent=1 // pred_check_branch
      %14 = sbr.rel (0) target = $region5
    $region4: #{tpu_custom_call.1} parent=1 // pred_region
      %16 = vsyncadd [#allocation3], 0
      %s18 = sshll.u32 %s0, 4
      %s19 = int_to_ptr.hbm [resolvable:$true] %s18
      %s20 = sshll.u32 [#allocation2], 4
      %s21 = int_to_ptr.vmem [resolvable:$true] %s20
      %23 = dma.hbm_to_vmem [thread:$0]  %s19, 128, %s21, [#allocation3]
    $region5: #{tpu_custom_call.1} parent=1 // pred_fallthru
      _
    // Predicated region
    $region6: #{tpu_custom_call.1} parent=1 // pred_check
      _
    $region7: #{tpu_custom_call.1} parent=1 // pred_check_branch
      %25 = sbr.rel (0) target = $region9
    $region8: #{tpu_custom_call.1} parent=1 // pred_region
      %27 = vsyncadd [#allocation6], 0
      %s29 = sshll.u32 %s1, 4
      %s30 = int_to_ptr.hbm [resolvable:$true] %s29
      %s31 = sshll.u32 [#allocation5], 4
      %s32 = int_to_ptr.vmem [resolvable:$true] %s31
      %34 = dma.hbm_to_vmem [thread:$0]  %s30, 128, %s32, [#allocation6]
    $region9: #{tpu_custom_call.1} parent=1 // pred_fallthru
      _
    // Predicated region
    $region10: #{tpu_custom_call.1} parent=1 // pred_check
      _
    $region11: #{tpu_custom_call.1} parent=1 // pred_check_branch
      %36 = sbr.rel (0) target = $region13
    $region12: #{tpu_custom_call.1} parent=1 // pred_region
      _
    $region13: #{tpu_custom_call.1} parent=1 // pred_fallthru
      _
    // Predicated region
    $region14: #{tpu_custom_call.1} parent=1 // pred_check
      _
    $region15: #{tpu_custom_call.1} parent=1 // pred_check_branch
      %38 = sbr.rel (0) target = $region17
    $region16: #{tpu_custom_call.1} parent=1 // pred_region
      %40 = vsyncadd [#allocation6], 0
      %s41 = sshll.u32 %s3, 4
      %s42 = int_to_ptr.hbm [resolvable:$true] %s41
      %s43 = sshll.u32 [#allocation7], 4
      %s44 = int_to_ptr.vmem [resolvable:$true] %s43
      %49 = dma.hbm_to_vmem [thread:$0]  %s42, 2048, %s44, [#allocation6], 128, 128, 8
    $region17: #{tpu_custom_call.1} parent=1 // pred_fallthru
      _
    // Predicated region
    $region18: #{tpu_custom_call.1} parent=1 // pred_check
      _
    $region19: #{tpu_custom_call.1} parent=1 // pred_check_branch
      %51 = sbr.rel (0) target = $region21
    $region20: #{tpu_custom_call.1} parent=1 // pred_region
      _
    $region21: #{tpu_custom_call.1} parent=1 // pred_fallthru
      _
    // Predicated region
    $region22: #{tpu_custom_call.1} parent=1 // pred_check
      _
    $region23: #{tpu_custom_call.1} parent=1 // pred_check_branch
      %53 = sbr.rel (0) target = $region25
    $region24: #{tpu_custom_call.1} parent=1 // pred_region
      %55 = dma.done [#allocation3], 128
    $region25: #{tpu_custom_call.1} parent=1 // pred_fallthru
      _
    // Predicated region
    $region26: #{tpu_custom_call.1} parent=1 // pred_check
      _
    $region27: #{tpu_custom_call.1} parent=1 // pred_check_branch
      %57 = sbr.rel (0) target = $region29
    $region28: #{tpu_custom_call.1} parent=1 // pred_region
      %59 = dma.done [#allocation6], 128
    $region29: #{tpu_custom_call.1} parent=1 // pred_fallthru
      _
    // Predicated region
    $region30: #{tpu_custom_call.1} parent=1 // pred_check
      _
    $region31: #{tpu_custom_call.1} parent=1 // pred_check_branch
      %61 = sbr.rel (0) target = $region33
    $region32: #{tpu_custom_call.1} parent=1 // pred_region
      %63 = dma.done [#allocation6], 2048
    $region33: #{tpu_custom_call.1} parent=1 // pred_fallthru
      _
    %v64 = vld [vmem:[#allocation2] sm:$0xff]
    %v65 = vld [vmem:[#allocation5] sm:$0xff]
    %v66 = vld [vmem:[%s2] sm:$0x1]
    %v68 = vperm.slane %v66, 0
    %vm70 = vcmask 64512
    %v72 = vsel %vm70, %v64, 0
    %74 = vmatpush.msra.mxu0 0.0
    %75 = vmatpush.msra.mxu0 0.0
    %76 = vmatpush.msra.mxu0 0.0
    %77 = vmatpush.msra.mxu0 0.0
    %78 = vmatpush.msra.mxu0 0.0
    %79 = vmatpush.msra.mxu0 0.0
    %80 = vmatpush.msra.mxu0 0.0
    %81 = vmatpush.msra.mxu0 0.0
    %82 = vmatpush.msra.mxu0 0.0
    %83 = vmatpush.msra.mxu0 0.0
    %84 = vmatpush.msra.mxu0 0.0
    %85 = vmatpush.msra.mxu0 0.0
    %86 = vmatpush.msra.mxu0 0.0
    %87 = vmatpush.msra.mxu0 0.0
    %88 = vmatpush.msra.mxu0 0.0
    %89 = vmatpush.msra.mxu0 %v65
    %90 = vmatmul.f32.gmra.mxu0 %v72
    %v91 = vpop.f32.mrf.mxu0
    %v92 = vadd.f32 %v68, %v91
    %93 = vdwg.mxu0
    %v94 = vmax.f32 %v92, 0.0
    %v95 = vld [vmem:[#allocation7] sm:$0xff]
    %v96 = vld [vmem:[#allocation7 + $0x8] sm:$0xff]
    %v97 = vld [vmem:[#allocation7 + $0x10] sm:$0xff]
    %v98 = vld [vmem:[#allocation7 + $0x18] sm:$0xff]
    %v99 = vld [vmem:[#allocation7 + $0x20] sm:$0xff]
    %v100 = vld [vmem:[#allocation7 + $0x28] sm:$0xff]
    %v101 = vld [vmem:[#allocation7 + $0x30] sm:$0xff]
    %v102 = vld [vmem:[#allocation7 + $0x38] sm:$0xff]
    %v103 = vld [vmem:[#allocation7 + $0x40] sm:$0xff]
    %v104 = vld [vmem:[#allocation7 + $0x48] sm:$0xff]
    %v105 = vld [vmem:[#allocation7 + $0x50] sm:$0xff]
    %v106 = vld [vmem:[#allocation7 + $0x58] sm:$0xff]
    %v107 = vld [vmem:[#allocation7 + $0x60] sm:$0xff]
    %v108 = vld [vmem:[#allocation7 + $0x68] sm:$0xff]
    %v109 = vld [vmem:[#allocation7 + $0x70] sm:$0xff]
    %v110 = vld [vmem:[#allocation7 + $0x78] sm:$0xff]
    %v111 = vld [vmem:[%s4] sm:$0x1]
    %v113 = vperm.slane %v111, 0
    %115 = vmatpush.msra.mxu0 %v110
    %116 = vmatpush.msra.mxu0 %v109
    %117 = vmatpush.msra.mxu0 %v108
    %118 = vmatpush.msra.mxu0 %v107
    %119 = vmatpush.msra.mxu0 %v106
    %120 = vmatpush.msra.mxu0 %v105
    %121 = vmatpush.msra.mxu0 %v104
    %122 = vmatpush.msra.mxu0 %v103
    %123 = vmatpush.msra.mxu0 %v102
    %124 = vmatpush.msra.mxu0 %v101
    %125 = vmatpush.msra.mxu0 %v100
    %126 = vmatpush.msra.mxu0 %v99
    %127 = vmatpush.msra.mxu0 %v98
    %128 = vmatpush.msra.mxu0 %v97
    %129 = vmatpush.msra.mxu0 %v96
    %130 = vmatpush.msra.mxu0 %v95
    %131 = vmatmul.f32.gmra.mxu0 %v94
    %v132 = vpop.f32.mrf.mxu0
    %v133 = vadd.f32 %v113, %v132
    %134 = vdwg.mxu0
    %v135 = vsub.f32 0.0, %v133
    %v136 = vmul.f32 %v135, 1.442695
    %v137 = vpow.pop %v136
    %v138 = vadd.f32 %v137, 1.0
    %v139 = vrcp.pop %v138
    %v140 = vmul.f32 %v138, %v139
    %v141 = vsub.f32 1.0, %v140
    %v142 = vmul.f32 %v139, %v141
    %v143 = vadd.f32 %v139, %v142
    %vm144 = vweird.f32 %v138
    %vm145 = vweird.f32 %v139
    %vm146 = vmor %vm144, %vm145
    %v147 = vsel %vm146, %v139, %v143
    %v148 = vand.u32 2147483647, %v138
    %vm149 = vcmp.eq.f32.partialorder %v148, 8.507059e+37
    %v150 = vand.u32 %v138, 2147483648
    %v151 = vor.u32 1.1754944e-38, %v150
    %v152 = vsel %vm149, %v151, %v147
    %v153 = vmul.f32 1.0, %v152
    %v154 = vlaneseq
    %v155 = vand.u32 %v154, 127
    %vm156 = vcmp.eq.s32.totalorder %v155, 0
    %vm157 = vcmp.eq.s32.totalorder %v155, 1
    %v158 = vsub.f32 1.0, %v153
    %v159 = vsel %vm157, %v158, 0.0
    %v160 = vsel %vm156, %v153, %v159
    %161 = vst [vmem:[#allocation8] sm:$0xff] %v160
    // Predicated region
    $region34: #{tpu_custom_call.1} parent=1 // pred_check
      _
    $region35: #{tpu_custom_call.1} parent=1 // pred_check_branch
      %163 = sbr.rel (0) target = $region37
    $region36: #{tpu_custom_call.1} parent=1 // pred_region
      %165 = vsyncadd [#allocation4], 0
      %s167 = sshll.u32 [#allocation8], 4
      %s168 = int_to_ptr.vmem [resolvable:$true] %s167
      %s169 = sshll.u32 %s5, 4
      %s170 = int_to_ptr.hbm [resolvable:$true] %s169
      %172 = dma.vmem_to_hbm [thread:$0]  %s168, 128, %s170, [#allocation4]
    $region37: #{tpu_custom_call.1} parent=1 // pred_fallthru
      _
    // Predicated region
    $region38: #{tpu_custom_call.1} parent=1 // pred_check
      _
    $region39: #{tpu_custom_call.1} parent=1 // pred_check_branch
      %174 = sbr.rel (0) target = $region41
    $region40: #{tpu_custom_call.1} parent=1 // pred_region
      %176 = dma.done [#allocation4], 128
    $region41: #{tpu_custom_call.1} parent=1 // pred_fallthru
      _
    %177 = vsyncpa [#allocation3], 1
    %178 = vsyncpa [#allocation6], 1
    %179 = vsyncpa [#allocation4], 1

</llo_original>
